<compile_context>
chip_gen: v5e
topology: v5e:2x2
jax: 0.10.0
libtpu: 0.0.40
codegen_flags: <defaults>
</compile_context>

<pallas_src>
import jax
import jax.numpy as jnp
from jax.experimental import pallas as pl
from jax.experimental.pallas import tpu as pltpu

INPUT_DIM = 512
H1 = 256
H2 = 64
H2P = 128   # zero-padded hidden-2 width (full 128-lane vregs / MXU K)
OUT = 1


def _mlp_kernel(x_ref, w1_ref, b1_ref, w2_ref, b2_ref, w3_ref, b3_ref, o_ref):
    # x tile: (TB, 512) f32 streamed from HBM; cast to bf16 here (in-kernel,
    # free under the DMA) instead of a separate wrapper-side convert pass.
    x = x_ref[...].astype(jnp.bfloat16)
    # Layer 1: Linear(512 -> 256) + ReLU   (Dropout(0.3) = identity at inference)
    h1 = jnp.dot(x, w1_ref[...], preferred_element_type=jnp.float32)
    h1 = jnp.maximum(h1 + b1_ref[...], 0.0)                         # (TB, 256) f32
    # Layer 2: Linear(256 -> 64) + ReLU, lane-padded to 128 (padded cols are 0)
    h2 = jnp.dot(h1.astype(jnp.bfloat16), w2_ref[...],
                 preferred_element_type=jnp.float32)
    h2 = jnp.maximum(h2 + b2_ref[...], 0.0)                         # (TB, 128) f32
    # Layer 3: Linear(64 -> 1) (padded w3 rows are 0 -> exact)
    out = jnp.dot(h2.astype(jnp.bfloat16), w3_ref[...],
                  preferred_element_type=jnp.float32)               # (TB, 1)
    o_ref[...] = (out + b3_ref[...]).astype(o_ref.dtype)
    # TODO(synk): training-mode Dropout(0.3) omitted (eval()/inference semantics).


def _pick_tile_b(B):
    """Largest batch tile giving a multi-step grid; prefer an even step count.

    An even number of grid steps keeps both v7x TensorCores equally busy under
    dimension_semantics=('parallel',); on single-TC v5e/v6e it is harmless.
    Candidates up to 4096 rows amortize the ~0.35 us/step grid overhead at
    large B while staying within the per-gen VMEM budget (see _vmem_budget).
    Row quantum 16 keeps (8,128) block rules and bf16 sublane packing happy.
    """
    candidates = (4096, 2048, 1024, 512, 256, 128, 64, 32, 16)
    for cand in candidates:                       # pass 1: even grid length
        if B % cand == 0 and (B // cand) >= 2 and (B // cand) % 2 == 0:
            return cand
    for cand in candidates:                       # pass 2: any >=2-step grid
        if B % cand == 0 and B // cand >= 2:
            return cand
    return B   # tiny / odd batch: one full-array block (always a legal block).


def _vmem_budget_bytes(tile_b):
    """Scoped-VMEM budget derived from the tile, clamped to fit every gen.

    Counts the double-buffered f32 x stream, the resident bf16 weights /
    f32 biases, the f32 + bf16 activation temps, and the tiny output stream,
    then adds ~50% headroom.  Clamped to [32 MiB, 48 MiB]: 48 MiB leaves
    headroom under v7x's 64 MiB physical VMEM, and v5e/v6e (128 MiB) can
    trivially afford it.
    """
    x_stream = 2 * tile_b * INPUT_DIM * 4                     # double-buffered f32 x
    out_stream = 2 * tile_b * OUT * 4
    weights = ((INPUT_DIM * H1 + H1 * H2P + H2P * OUT) * 2    # bf16 weights
               + (H1 + H2P + OUT) * 4) * 2                    # f32 biases, x2 buffers
    temps = tile_b * (H1 + H2P) * (4 + 2) + tile_b * INPUT_DIM * 2   # f32 + bf16 copies
    need = x_stream + out_stream + weights + temps
    budget = int(need * 1.5) + (4 << 20)
    return max(32 << 20, min(budget, 48 << 20))


def prepare_params(params):
    """One-time weight preprocessing, hoisted out of the per-call path.

    Zero-pads the narrow middle layer 64 -> 128 (exact: relu(0+0)=0, padded
    w3 rows are 0) so layers 2-3 use full 128-lane vregs, and casts weights
    to bf16 (MXU operands) while keeping biases f32 (VPU adds).
    """
    w1, b1, w2, b2, w3, b3 = params
    pad2 = H2P - H2
    w2p = jnp.pad(w2, ((0, 0), (0, pad2)))
    b2p = jnp.pad(b2, ((0, 0), (0, pad2)))
    w3p = jnp.pad(w3, ((0, pad2), (0, 0)))
    bf = lambda a: a.astype(jnp.bfloat16)
    return (bf(w1), b1.astype(jnp.float32),
            bf(w2p), b2p.astype(jnp.float32),
            bf(w3p), b3.astype(jnp.float32))


def age_regressor_forward(x, prepared_params, *, tile_b=None):
    """x: (B, 512) float32 -> (B,) float32 (matching torch .squeeze())."""
    B, D = x.shape
    assert D == INPUT_DIM
    w1_b, b1_f, w2_b, b2_f, w3_b, b3_f = prepared_params

    if tile_b is None:
        tile_b = _pick_tile_b(B)
    assert B % tile_b == 0, "batch must be divisible by tile_b"
    assert tile_b == B or tile_b % 16 == 0, (
        "tile_b must be a multiple of 16 or equal to B")
    grid = (B // tile_b,)

    # Weights/biases are broadcast to every batch tile (block index 0 always),
    # so they are fetched once and stay VMEM-resident across the grid.
    full = lambda shape: pl.BlockSpec(shape, lambda i: (0, 0))

    out = pl.pallas_call(
        _mlp_kernel,
        out_shape=jax.ShapeDtypeStruct((B, OUT), jnp.float32),
        grid_spec=pltpu.PrefetchScalarGridSpec(
            num_scalar_prefetch=0,
            grid=grid,
            in_specs=[
                pl.BlockSpec((tile_b, INPUT_DIM), lambda i: (i, 0)),  # x, f32 stream
                full((INPUT_DIM, H1)),   # w1 (bf16)
                full((1, H1)),           # b1 (f32)
                full((H1, H2P)),         # w2 (bf16, padded)
                full((1, H2P)),          # b2 (f32, padded)
                full((H2P, OUT)),        # w3 (bf16, padded)
                full((1, OUT)),          # b3 (f32)
            ],
            out_specs=pl.BlockSpec((tile_b, OUT), lambda i: (i, 0)),
        ),
        compiler_params=pltpu.CompilerParams(
            # Multi-block batch grid -> pipelined x DMA + megacore split on v7x.
            dimension_semantics=("parallel",),
            # Tile-derived scoped-VMEM budget, clamped to fit v5e/v6e/v7x.
            vmem_limit_bytes=_vmem_budget_bytes(tile_b),
        ),
    )(x, w1_b, b1_f, w2_b, b2_f, w3_b, b3_f)

    # (B, 1) -> (B,): removing a trailing unit dim is a free XLA bitcast.
    return jnp.reshape(out, (B,))


def init_params(key):
    """Deterministic synthetic parameters (shapes per AgeRegressor.__init__)."""
    k1, k2, k3, k4, k5, k6 = jax.random.split(key, 6)

    def unif(k, shape, fan_in):
        bound = 1.0 / jnp.sqrt(fan_in)
        return jax.random.uniform(k, shape, jnp.float32, -bound, bound)

    w1 = unif(k1, (INPUT_DIM, H1), INPUT_DIM)
    b1 = unif(k2, (1, H1), INPUT_DIM)
    w2 = unif(k3, (H1, H2), H1)
    b2 = unif(k4, (1, H2), H1)
    w3 = unif(k5, (H2, OUT), H2)
    b3 = unif(k6, (1, OUT), H2)
    return (w1, b1, w2, b2, w3, b3)


def reference_forward(x, params):
    """Pure-JAX reference with the same bf16 operand rounding the kernel uses."""
    w1, b1, w2, b2, w3, b3 = params
    bf = lambda a: a.astype(jnp.bfloat16)
    h = jnp.maximum(
        jnp.dot(bf(x), bf(w1), preferred_element_type=jnp.float32) + b1, 0.0)
    h = jnp.maximum(
        jnp.dot(bf(h), bf(w2), preferred_element_type=jnp.float32) + b2, 0.0)
    out = jnp.dot(bf(h), bf(w3), preferred_element_type=jnp.float32) + b3
    return jnp.squeeze(out, axis=-1)


if __name__ == "__main__":
    key = jax.random.PRNGKey(0)
    kx, kp = jax.random.split(key)
    params = init_params(kp)
    prepared = prepare_params(params)   # one-time pad + bf16 cast (hoisted)

    # Multi-block grid path: B=64 -> tile_b=32, grid=(2,) (even step count),
    # exercising the pipelined f32 x stream + in-kernel bf16 cast.
    B = 64
    x = jax.random.normal(kx, (B, INPUT_DIM), jnp.float32)
    y = jax.block_until_ready(age_regressor_forward(x, prepared))
    y_ref = reference_forward(x, params)
    assert y.shape == (B,), y.shape
    assert jnp.allclose(y, y_ref, atol=1e-2, rtol=1e-2), (y[:4], y_ref[:4])

    # Fallback path: tiny batch -> single full-array block (tile_b == B).
    xs = jax.random.normal(kx, (8, INPUT_DIM), jnp.float32)
    ys = jax.block_until_ready(age_regressor_forward(xs, prepared))
    ys_ref = reference_forward(xs, params)
    assert ys.shape == (8,), ys.shape
    assert jnp.allclose(ys, ys_ref, atol=1e-2, rtol=1e-2), (ys, ys_ref)

    print("KERNEL_OK")
</pallas_src>

<mosaic_0001>
module attributes {stable_mosaic.version = 11 : i64} {
  func.func @_mlp_kernel(%arg0: i32, %arg1: memref<32x512xf32, #tpu.memory_space<vmem>>, %arg2: memref<512x256xbf16, #tpu.memory_space<vmem>>, %arg3: memref<1x256xf32, #tpu.memory_space<vmem>>, %arg4: memref<256x128xbf16, #tpu.memory_space<vmem>>, %arg5: memref<1x128xf32, #tpu.memory_space<vmem>>, %arg6: memref<128x1xbf16, #tpu.memory_space<vmem>>, %arg7: memref<1x1xf32, #tpu.memory_space<vmem>>, %arg8: memref<32x1xf32, #tpu.memory_space<vmem>>) attributes {dimension_semantics = [#tpu.dimension_semantics<parallel>], iteration_bounds = array<i64: 2>, scalar_prefetch = 0 : i64, scratch_operands = 0 : i64, tpu.core_type = #tpu.core_type<tc>, window_params = [{transform_indices = @transform_0, window_bounds = array<i64: 32, 512>}, {pipeline_mode = #tpu.pipeline_mode<synchronous>, transform_indices = @transform_1, window_bounds = array<i64: 512, 256>}, {pipeline_mode = #tpu.pipeline_mode<synchronous>, transform_indices = @transform_2, window_bounds = array<i64: 1, 256>}, {pipeline_mode = #tpu.pipeline_mode<synchronous>, transform_indices = @transform_3, window_bounds = array<i64: 256, 128>}, {pipeline_mode = #tpu.pipeline_mode<synchronous>, transform_indices = @transform_4, window_bounds = array<i64: 1, 128>}, {pipeline_mode = #tpu.pipeline_mode<synchronous>, transform_indices = @transform_5, window_bounds = array<i64: 128, 1>}, {pipeline_mode = #tpu.pipeline_mode<synchronous>, transform_indices = @transform_6, window_bounds = array<i64: 1, 1>}, {transform_indices = @transform_7, window_bounds = array<i64: 32, 1>}]} {
    %c0 = arith.constant 0 : index
    %c0_0 = arith.constant 0 : index
    %0 = vector.load %arg1[%c0, %c0_0] : memref<32x512xf32, #tpu.memory_space<vmem>>, vector<32x512xf32>
    %1 = arith.truncf %0 : vector<32x512xf32> to vector<32x512xbf16>
    %c0_1 = arith.constant 0 : index
    %c0_2 = arith.constant 0 : index
    %2 = vector.load %arg2[%c0_1, %c0_2] : memref<512x256xbf16, #tpu.memory_space<vmem>>, vector<512x256xbf16>
    %cst = arith.constant dense<0.000000e+00> : vector<32x256xf32>
    %3 = tpu.matmul %1, %2, %cst {dimension_numbers = #tpu.dot_dimension_numbers<[1], [0], [0], [1], [0, 0, 1, 1], [], []>} : vector<32x512xbf16>, vector<512x256xbf16>, vector<32x256xf32> -> vector<32x256xf32>
    %c0_3 = arith.constant 0 : index
    %c0_4 = arith.constant 0 : index
    %4 = vector.load %arg3[%c0_3, %c0_4] : memref<1x256xf32, #tpu.memory_space<vmem>>, vector<1x256xf32>
    %5 = vector.broadcast %4 : vector<1x256xf32> to vector<32x256xf32>
    %6 = arith.addf %3, %5 : vector<32x256xf32>
    %cst_5 = arith.constant 0.000000e+00 : f32
    %7 = vector.broadcast %cst_5 : f32 to vector<32x256xf32>
    %8 = arith.maximumf %6, %7 : vector<32x256xf32>
    %9 = arith.truncf %8 : vector<32x256xf32> to vector<32x256xbf16>
    %c0_6 = arith.constant 0 : index
    %c0_7 = arith.constant 0 : index
    %10 = vector.load %arg4[%c0_6, %c0_7] : memref<256x128xbf16, #tpu.memory_space<vmem>>, vector<256x128xbf16>
    %cst_8 = arith.constant dense<0.000000e+00> : vector<32x128xf32>
    %11 = tpu.matmul %9, %10, %cst_8 {dimension_numbers = #tpu.dot_dimension_numbers<[1], [0], [0], [1], [0, 0, 1, 1], [], []>} : vector<32x256xbf16>, vector<256x128xbf16>, vector<32x128xf32> -> vector<32x128xf32>
    %c0_9 = arith.constant 0 : index
    %c0_10 = arith.constant 0 : index
    %12 = vector.load %arg5[%c0_9, %c0_10] : memref<1x128xf32, #tpu.memory_space<vmem>>, vector<1x128xf32>
    %13 = vector.broadcast %12 : vector<1x128xf32> to vector<32x128xf32>
    %14 = arith.addf %11, %13 : vector<32x128xf32>
    %cst_11 = arith.constant 0.000000e+00 : f32
    %15 = vector.broadcast %cst_11 : f32 to vector<32x128xf32>
    %16 = arith.maximumf %14, %15 : vector<32x128xf32>
    %17 = arith.truncf %16 : vector<32x128xf32> to vector<32x128xbf16>
    %c0_12 = arith.constant 0 : index
    %c0_13 = arith.constant 0 : index
    %18 = vector.load %arg6[%c0_12, %c0_13] : memref<128x1xbf16, #tpu.memory_space<vmem>>, vector<128x1xbf16>
    %cst_14 = arith.constant dense<0.000000e+00> : vector<32x1xf32>
    %19 = tpu.matmul %17, %18, %cst_14 {dimension_numbers = #tpu.dot_dimension_numbers<[1], [0], [0], [1], [0, 0, 1, 1], [], []>} : vector<32x128xbf16>, vector<128x1xbf16>, vector<32x1xf32> -> vector<32x1xf32>
    %c0_15 = arith.constant 0 : index
    %c0_16 = arith.constant 0 : index
    %20 = vector.load %arg7[%c0_15, %c0_16] : memref<1x1xf32, #tpu.memory_space<vmem>>, vector<1x1xf32>
    %21 = vector.broadcast %20 : vector<1x1xf32> to vector<32x1xf32>
    %22 = arith.addf %19, %21 : vector<32x1xf32>
    %c0_17 = arith.constant 0 : index
    %c0_18 = arith.constant 0 : index
    %23 = vector.load %arg8[%c0_17, %c0_18] : memref<32x1xf32, #tpu.memory_space<vmem>>, vector<32x1xf32>
    tpu.vector_store %arg8[%c0_17, %c0_18], %22 {strides = array<i32>} : memref<32x1xf32, #tpu.memory_space<vmem>>, vector<32x1xf32>,
    return
  }
  func.func @transform_0(%arg0: i32) -> (i32, i32) {
    %c0_i32 = arith.constant 0 : i32
    %c0_i32_0 = arith.constant 0 : i32
    return %arg0, %c0_i32 : i32, i32
  }
  func.func @transform_1(%arg0: i32) -> (i32, i32) {
    %c0_i32 = arith.constant 0 : i32
    %c0_i32_0 = arith.constant 0 : i32
    %c0_i32_1 = arith.constant 0 : i32
    return %c0_i32, %c0_i32_0 : i32, i32
  }
  func.func @transform_2(%arg0: i32) -> (i32, i32) {
    %c0_i32 = arith.constant 0 : i32
    %c0_i32_0 = arith.constant 0 : i32
    %c0_i32_1 = arith.constant 0 : i32
    return %c0_i32, %c0_i32_0 : i32, i32
  }
  func.func @transform_3(%arg0: i32) -> (i32, i32) {
    %c0_i32 = arith.constant 0 : i32
    %c0_i32_0 = arith.constant 0 : i32
    %c0_i32_1 = arith.constant 0 : i32
    return %c0_i32, %c0_i32_0 : i32, i32
  }
  func.func @transform_4(%arg0: i32) -> (i32, i32) {
    %c0_i32 = arith.constant 0 : i32
    %c0_i32_0 = arith.constant 0 : i32
    %c0_i32_1 = arith.constant 0 : i32
    return %c0_i32, %c0_i32_0 : i32, i32
  }
  func.func @transform_5(%arg0: i32) -> (i32, i32) {
    %c0_i32 = arith.constant 0 : i32
    %c0_i32_0 = arith.constant 0 : i32
    %c0_i32_1 = arith.constant 0 : i32
    return %c0_i32, %c0_i32_0 : i32, i32
  }
  func.func @transform_6(%arg0: i32) -> (i32, i32) {
    %c0_i32 = arith.constant 0 : i32
    %c0_i32_0 = arith.constant 0 : i32
    %c0_i32_1 = arith.constant 0 : i32
    return %c0_i32, %c0_i32_0 : i32, i32
  }
  func.func @transform_7(%arg0: i32) -> (i32, i32) {
    %c0_i32 = arith.constant 0 : i32
    %c0_i32_0 = arith.constant 0 : i32
    return %arg0, %c0_i32 : i32, i32
  }
}

</mosaic_0001>

<llo_original>
// kernel: tpu_custom_call.1
$region0: #{tpu_custom_call.1}
  #allocation0 [shape = 'u32[]', space=smem, size = 0x4, offset = 0x4, fixed_abs, tag = 'smem constant byte address 0x4 - core index']
  #allocation1 [shape = 'u32[72,128]{1,0:T(1,128)}', space=vmem, size = 0x9000, scoped, tag = 'internal scratch']
  #allocation2 [shape = 'f32[1,1]{1,0:T(1,128)S(1)}', space=vmem, size = 0x200, scoped, tag = 'scoped memory for tpu_custom_call.1']
  %s0 = inlined_call_operand.hbm [shape: f32[64,512], index: 0, kind: input, shape index: {}]
  %s1 = inlined_call_operand.hbm [shape: bf16[512,256], index: 1, kind: input, shape index: {}]
  %s2 = inlined_call_operand.vmem [shape: f32[1,256], index: 2, kind: input, shape index: {}]
  %s3 = inlined_call_operand.hbm [shape: bf16[256,128], index: 3, kind: input, shape index: {}]
  %s4 = inlined_call_operand.vmem [shape: f32[1,128], index: 4, kind: input, shape index: {}]
  %s5 = inlined_call_operand.vmem [shape: bf16[128,1], index: 5, kind: input, shape index: {}]
  %s6 = inlined_call_operand.<no memory space> [shape: f32[1,1], index: 6, kind: input, shape index: {}]
  %s7 = inlined_call_operand.vmem [shape: f32[64,1], index: 7, kind: output, shape index: {}]
  %s8 = sld [smem:[#allocation0]]
  $region73: #{tpu_custom_call.1} parent=0
    _
  %s10 = ssub.s32 1, %s8
  %s11 = scalar_select 0, %s10, %s8
  %v12 = vstv %s6
  %13 = vst [vmem:[#allocation2] sm:$0x1] %v12
  $region1: #{tpu_custom_call.1} parent=0
    #allocation3 [shape = 'u8[131072]{0}', space=vmem, size = 0x20000, scoped, tag = 'input window, operand 0']
    #allocation4 [shape = 's32[2]{0}', space=sflag, size = 0x8, scoped, tag = 'scoped memory for tpu_custom_call.1']
    #allocation5 [shape = 'u8[262144]{0}', space=vmem, size = 0x40000, scoped, tag = 'input window, operand 1, single buffered']
    #allocation6 [shape = 's32[1]{0}', space=sflag, size = 0x4, scoped, tag = 'scoped memory for tpu_custom_call.1']
    #allocation7 [shape = 'u8[65536]{0}', space=vmem, size = 0x10000, scoped, tag = 'input window, operand 3, single buffered']
    %14 = vsyncpa [#allocation4], 0
    %s15 = scalar_lea.sflag [#allocation4], 1
    %16 = vsyncpa %s15, 0
    %17 = vsyncpa [#allocation6], 0
    loop: start=0, step=1, limit=4
    $region2: #{tpu_custom_call.1} parent=1 // loop_pre_header
      _
    $region3: #{tpu_custom_call.1} parent=1 // loop_header
      %s19 = sphi 0, %s23
      %p20 = scmp.ge.s32.totalorder %s19, 4
      %s29 = sphi 0, %s31
      %s32 = sphi 0, %s29
      %s33 = sphi 0, %s32
      %s49 = sphi 0, %s33
      %s53 = sphi 0, %s53
      %s55 = sphi 0, %s53
      %s56 = sphi 0, %s55
      %s70 = sphi 0, %s56
      %s74 = sphi 0, %s74
      %s76 = sphi 0, %s74
      %s77 = sphi 0, %s76
      %s91 = sphi 0, %s77
      %s95 = sphi 0, %s95
      %s97 = sphi 0, %s95
      %s98 = sphi 0, %s97
      %s112 = sphi 0, %s98
      %s116 = sphi 0, %s116
      %s118 = sphi 0, %s116
      %s119 = sphi 0, %s118
      %s133 = sphi 0, %s119
      %s137 = sphi 0, %s137
      %s139 = sphi 0, %s137
      %s140 = sphi 0, %s139
      %s154 = sphi 0, %s140
      %s158 = sphi 0, %s158
      %s160 = sphi 0, %s158
      %s161 = sphi 0, %s160
      %s175 = sphi 0, %s161
      %s181 = sphi 0, %s183
      %s184 = sphi 0, %s181
      %s185 = sphi 0, %s184
      %s201 = sphi 0, %s185
    $region4: #{tpu_custom_call.1} parent=1 // loop_header_branch
      %22 = sbr.rel (%p20) target = $region8
    $region5: #{tpu_custom_call.1} parent=1 // loop_body
      %s24 = ssub.s32 %s19, 1
      %s25 = ssub.s32 %s19, 2
      %s26 = sadd.s32 %s19, 1
      %s27 = ssub.s32 %s19, %s26
      %p28 = scmp.eq.s32.totalorder %s27, 0
      %s30 = sadd.s32 %s29, 1
      %s31 = scalar_select %p28, %s29, %s30
      %p34 = pneg %p28
      %p35 = scmp.eq.s32.totalorder %s19, 1
      %p36 = por %p34, %p35
      %p37 = scmp.ne.s32.totalorder %s29, %s32
      %p38 = scmp.eq.s32.totalorder %s19, 0
      %p39 = por %p37, %p38
      %p40 = scmp.ne.s32.totalorder %s29, %s32
      %p41 = scmp.eq.s32.totalorder %s24, 1
      %p42 = por %p40, %p41
      %p43 = scmp.ne.s32.totalorder %s32, %s33
      %p44 = scmp.eq.s32.totalorder %s24, 0
      %p45 = por %p43, %p44
      %p46 = scmp.ne.s32.totalorder %s32, %s33
      %p47 = scmp.eq.s32.totalorder %s25, 1
      %p48 = por %p46, %p47
      %p50 = scmp.ne.s32.totalorder %s33, %s49
      %p51 = scmp.eq.s32.totalorder %s25, 0
      %p52 = por %p50, %p51
      %s54 = sadd.s32 %s53, 1
      %p57 = scmp.eq.s32.totalorder %s19, 1
      %p58 = scmp.ne.s32.totalorder %s53, %s55
      %p59 = scmp.eq.s32.totalorder %s19, 0
      %p60 = por %p58, %p59
      %p61 = scmp.ne.s32.totalorder %s53, %s55
      %p62 = scmp.eq.s32.totalorder %s24, 1
      %p63 = por %p61, %p62
      %p64 = scmp.ne.s32.totalorder %s55, %s56
      %p65 = scmp.eq.s32.totalorder %s24, 0
      %p66 = por %p64, %p65
      %p67 = scmp.ne.s32.totalorder %s55, %s56
      %p68 = scmp.eq.s32.totalorder %s25, 1
      %p69 = por %p67, %p68
      %p71 = scmp.ne.s32.totalorder %s56, %s70
      %p72 = scmp.eq.s32.totalorder %s25, 0
      %p73 = por %p71, %p72
      %s75 = sadd.s32 %s74, 1
      %p78 = scmp.eq.s32.totalorder %s19, 1
      %p79 = scmp.ne.s32.totalorder %s74, %s76
      %p80 = scmp.eq.s32.totalorder %s19, 0
      %p81 = por %p79, %p80
      %p82 = scmp.ne.s32.totalorder %s74, %s76
      %p83 = scmp.eq.s32.totalorder %s24, 1
      %p84 = por %p82, %p83
      %p85 = scmp.ne.s32.totalorder %s76, %s77
      %p86 = scmp.eq.s32.totalorder %s24, 0
      %p87 = por %p85, %p86
      %p88 = scmp.ne.s32.totalorder %s76, %s77
      %p89 = scmp.eq.s32.totalorder %s25, 1
      %p90 = por %p88, %p89
      %p92 = scmp.ne.s32.totalorder %s77, %s91
      %p93 = scmp.eq.s32.totalorder %s25, 0
      %p94 = por %p92, %p93
      %s96 = sadd.s32 %s95, 1
      %p99 = scmp.eq.s32.totalorder %s19, 1
      %p100 = scmp.ne.s32.totalorder %s95, %s97
      %p101 = scmp.eq.s32.totalorder %s19, 0
      %p102 = por %p100, %p101
      %p103 = scmp.ne.s32.totalorder %s95, %s97
      %p104 = scmp.eq.s32.totalorder %s24, 1
      %p105 = por %p103, %p104
      %p106 = scmp.ne.s32.totalorder %s97, %s98
      %p107 = scmp.eq.s32.totalorder %s24, 0
      %p108 = por %p106, %p107
      %p109 = scmp.ne.s32.totalorder %s97, %s98
      %p110 = scmp.eq.s32.totalorder %s25, 1
      %p111 = por %p109, %p110
      %p113 = scmp.ne.s32.totalorder %s98, %s112
      %p114 = scmp.eq.s32.totalorder %s25, 0
      %p115 = por %p113, %p114
      %s117 = sadd.s32 %s116, 1
      %p120 = scmp.eq.s32.totalorder %s19, 1
      %p121 = scmp.ne.s32.totalorder %s116, %s118
      %p122 = scmp.eq.s32.totalorder %s19, 0
      %p123 = por %p121, %p122
      %p124 = scmp.ne.s32.totalorder %s116, %s118
      %p125 = scmp.eq.s32.totalorder %s24, 1
      %p126 = por %p124, %p125
      %p127 = scmp.ne.s32.totalorder %s118, %s119
      %p128 = scmp.eq.s32.totalorder %s24, 0
      %p129 = por %p127, %p128
      %p130 = scmp.ne.s32.totalorder %s118, %s119
      %p131 = scmp.eq.s32.totalorder %s25, 1
      %p132 = por %p130, %p131
      %p134 = scmp.ne.s32.totalorder %s119, %s133
      %p135 = scmp.eq.s32.totalorder %s25, 0
      %p136 = por %p134, %p135
      %s138 = sadd.s32 %s137, 1
      %p141 = scmp.eq.s32.totalorder %s19, 1
      %p142 = scmp.ne.s32.totalorder %s137, %s139
      %p143 = scmp.eq.s32.totalorder %s19, 0
      %p144 = por %p142, %p143
      %p145 = scmp.ne.s32.totalorder %s137, %s139
      %p146 = scmp.eq.s32.totalorder %s24, 1
      %p147 = por %p145, %p146
      %p148 = scmp.ne.s32.totalorder %s139, %s140
      %p149 = scmp.eq.s32.totalorder %s24, 0
      %p150 = por %p148, %p149
      %p151 = scmp.ne.s32.totalorder %s139, %s140
      %p152 = scmp.eq.s32.totalorder %s25, 1
      %p153 = por %p151, %p152
      %p155 = scmp.ne.s32.totalorder %s140, %s154
      %p156 = scmp.eq.s32.totalorder %s25, 0
      %p157 = por %p155, %p156
      %s159 = sadd.s32 %s158, 1
      %p162 = scmp.eq.s32.totalorder %s19, 1
      %p163 = scmp.ne.s32.totalorder %s158, %s160
      %p164 = scmp.eq.s32.totalorder %s19, 0
      %p165 = por %p163, %p164
      %p166 = scmp.ne.s32.totalorder %s158, %s160
      %p167 = scmp.eq.s32.totalorder %s24, 1
      %p168 = por %p166, %p167
      %p169 = scmp.ne.s32.totalorder %s160, %s161
      %p170 = scmp.eq.s32.totalorder %s24, 0
      %p171 = por %p169, %p170
      %p172 = scmp.ne.s32.totalorder %s160, %s161
      %p173 = scmp.eq.s32.totalorder %s25, 1
      %p174 = por %p172, %p173
      %p176 = scmp.ne.s32.totalorder %s161, %s175
      %p177 = scmp.eq.s32.totalorder %s25, 0
      %p178 = por %p176, %p177
      %s179 = ssub.s32 %s19, %s26
      %p180 = scmp.eq.s32.totalorder %s179, 0
      %s182 = sadd.s32 %s181, 1
      %s183 = scalar_select %p180, %s181, %s182
      %p186 = pneg %p180
      %p187 = scmp.eq.s32.totalorder %s19, 1
      %p188 = por %p186, %p187
      %p189 = scmp.ne.s32.totalorder %s181, %s184
      %p190 = scmp.eq.s32.totalorder %s19, 0
      %p191 = por %p189, %p190
      %p192 = scmp.ne.s32.totalorder %s181, %s184
      %p193 = scmp.eq.s32.totalorder %s24, 1
      %p194 = por %p192, %p193
      %p195 = scmp.ne.s32.totalorder %s184, %s185
      %p196 = scmp.eq.s32.totalorder %s24, 0
      %p197 = por %p195, %p196
      %p198 = scmp.ne.s32.totalorder %s184, %s185
      %p199 = scmp.eq.s32.totalorder %s25, 1
      %p200 = por %p198, %p199
      %p202 = scmp.ne.s32.totalorder %s185, %s201
      %p203 = scmp.eq.s32.totalorder %s25, 0
      %p204 = por %p202, %p203
      %p205 = scmp.le.s32.totalorder 1, %s19
      %p206 = scmp.lt.s32.totalorder %s19, 3
      %p207 = pnand %p205, %p206
      %p208 = pneg %p207
      // Predicated region
      $region9: #{tpu_custom_call.1} parent=5 // pred_check
        _
      $region10: #{tpu_custom_call.1} parent=5 // pred_check_branch
        %210 = sbr.rel (%p207) target = $region12
      $region11: #{tpu_custom_call.1} parent=5 // pred_region
        %s211 = ssub.s32 %s19, 1
        // Predicated region
        $region13: #{tpu_custom_call.1} parent=11 // pred_check
          %p212 = pneg %p66
        $region14: #{tpu_custom_call.1} parent=11 // pred_check_branch
          %214 = sbr.rel (%p212) target = $region16
        $region15: #{tpu_custom_call.1} parent=11 // pred_region
          %216 = vsyncadd [#allocation6], 0
          %s217 = sshll.u32 %s1, 4
          %s218 = int_to_ptr.hbm [resolvable:$true] %s217
          %s219 = sshll.u32 [#allocation5], 4
          %s220 = int_to_ptr.vmem [resolvable:$true] %s219
          %225 = dma.hbm_to_vmem [thread:$0]  %s218, 8192, %s220, [#allocation6], 128, 128, 8
        $region16: #{tpu_custom_call.1} parent=11 // pred_fallthru
          _
        // Predicated region
        $region17: #{tpu_custom_call.1} parent=11 // pred_check
          %p226 = pneg %p87
        $region18: #{tpu_custom_call.1} parent=11 // pred_check_branch
          %228 = sbr.rel (%p226) target = $region20
        $region19: #{tpu_custom_call.1} parent=11 // pred_region
          _
        $region20: #{tpu_custom_call.1} parent=11 // pred_fallthru
          _
        // Predicated region
        $region21: #{tpu_custom_call.1} parent=11 // pred_check
          %p229 = pneg %p108
        $region22: #{tpu_custom_call.1} parent=11 // pred_check_branch
          %231 = sbr.rel (%p229) target = $region24
        $region23: #{tpu_custom_call.1} parent=11 // pred_region
          %233 = vsyncadd [#allocation6], 0
          %s234 = sshll.u32 %s3, 4
          %s235 = int_to_ptr.hbm [resolvable:$true] %s234
          %s236 = sshll.u32 [#allocation7], 4
          %s237 = int_to_ptr.vmem [resolvable:$true] %s236
          %242 = dma.hbm_to_vmem [thread:$0]  %s235, 2048, %s237, [#allocation6], 64, 64, 4
        $region24: #{tpu_custom_call.1} parent=11 // pred_fallthru
          _
        // Predicated region
        $region25: #{tpu_custom_call.1} parent=11 // pred_check
          %p243 = pneg %p129
        $region26: #{tpu_custom_call.1} parent=11 // pred_check_branch
          %245 = sbr.rel (%p243) target = $region28
        $region27: #{tpu_custom_call.1} parent=11 // pred_region
          _
        $region28: #{tpu_custom_call.1} parent=11 // pred_fallthru
          _
        // Predicated region
        $region29: #{tpu_custom_call.1} parent=11 // pred_check
          %p246 = pneg %p150
        $region30: #{tpu_custom_call.1} parent=11 // pred_check_branch
          %248 = sbr.rel (%p246) target = $region32
        $region31: #{tpu_custom_call.1} parent=11 // pred_region
          _
        $region32: #{tpu_custom_call.1} parent=11 // pred_fallthru
          _
        // Predicated region
        $region33: #{tpu_custom_call.1} parent=11 // pred_check
          %p249 = pneg %p171
        $region34: #{tpu_custom_call.1} parent=11 // pred_check_branch
          %251 = sbr.rel (%p249) target = $region36
        $region35: #{tpu_custom_call.1} parent=11 // pred_region
          _
        $region36: #{tpu_custom_call.1} parent=11 // pred_fallthru
          _
      $region12: #{tpu_custom_call.1} parent=5 // pred_fallthru
        _
      %p252 = scmp.lt.s32.totalorder %s19, 2
      // Predicated region
      $region37: #{tpu_custom_call.1} parent=5 // pred_check
        %p253 = pneg %p252
      $region38: #{tpu_custom_call.1} parent=5 // pred_check_branch
        %255 = sbr.rel (%p253) target = $region40
      $region39: #{tpu_custom_call.1} parent=5 // pred_region
        // Predicated region
        $region41: #{tpu_custom_call.1} parent=39 // pred_check
          %p256 = pneg %p39
        $region42: #{tpu_custom_call.1} parent=39 // pred_check_branch
          %258 = sbr.rel (%p256) target = $region44
        $region43: #{tpu_custom_call.1} parent=39 // pred_region
          %s259 = sand.u32 %s29, 1
          %s260 = scalar_lea.sflag [#allocation4], %s259
          %s261 = sand.u32 %s29, 1
          %s262 = smul.addr %s261, 128
          %s263 = scalar_lea.vmem [#allocation3], %s262
          %s264 = smul.u32 4, %s19
          %266 = vsyncadd %s260, 0
          %s267 = smul.addr %s264, 4
          %s268 = smul.addr %s267, 8
          %s269 = scalar_lea.hbm %s0, %s268
          %s270 = sshll.u32 %s269, 4
          %s271 = int_to_ptr.hbm [resolvable:$true] %s270
          %s272 = sshll.u32 %s263, 4
          %s273 = int_to_ptr.vmem [resolvable:$true] %s272
          %278 = dma.hbm_to_vmem [thread:$0]  %s271, 2048, %s273, %s260, 512, 512, 32
        $region44: #{tpu_custom_call.1} parent=39 // pred_fallthru
          _
      $region40: #{tpu_custom_call.1} parent=5 // pred_fallthru
        _
      %p279 = scmp.le.s32.totalorder 1, %s19
      %p280 = scmp.lt.s32.totalorder %s19, 3
      %p281 = pnand %p279, %p280
      %p282 = pneg %p281
      // Predicated region
      $region45: #{tpu_custom_call.1} parent=5 // pred_check
        _
      $region46: #{tpu_custom_call.1} parent=5 // pred_check_branch
        %284 = sbr.rel (%p281) target = $region48
      $region47: #{tpu_custom_call.1} parent=5 // pred_region
        %s285 = ssub.s32 %s19, 1
        %s286 = sand.u32 %s32, 1
        %s287 = scalar_lea.sflag [#allocation4], %s286
        %s288 = sand.u32 %s32, 1
        %s289 = smul.addr %s288, 128
        %s290 = scalar_lea.vmem [#allocation3], %s289
        // Predicated region
        $region49: #{tpu_custom_call.1} parent=47 // pred_check
          %p291 = pneg %p45
        $region50: #{tpu_custom_call.1} parent=47 // pred_check_branch
          %293 = sbr.rel (%p291) target = $region52
        $region51: #{tpu_custom_call.1} parent=47 // pred_region
          %295 = dma.done %s287, 2048
        $region52: #{tpu_custom_call.1} parent=47 // pred_fallthru
          _
        // Predicated region
        $region53: #{tpu_custom_call.1} parent=47 // pred_check
          %p296 = pneg %p66
        $region54: #{tpu_custom_call.1} parent=47 // pred_check_branch
          %298 = sbr.rel (%p296) target = $region56
        $region55: #{tpu_custom_call.1} parent=47 // pred_region
          %300 = dma.done [#allocation6], 8192
        $region56: #{tpu_custom_call.1} parent=47 // pred_fallthru
          _
        // Predicated region
        $region57: #{tpu_custom_call.1} parent=47 // pred_check
          %p301 = pneg %p108
        $region58: #{tpu_custom_call.1} parent=47 // pred_check_branch
          %303 = sbr.rel (%p301) target = $region60
        $region59: #{tpu_custom_call.1} parent=47 // pred_region
          %305 = dma.done [#allocation6], 2048
        $region60: #{tpu_custom_call.1} parent=47 // pred_fallthru
          _
        %s306 = sand.u32 %s32, 1
        %s307 = scalar_lea.sflag [#allocation4], %s306
        %s308 = sand.u32 %s32, 1
        %s309 = smul.addr %s308, 128
        %s310 = scalar_lea.vmem [#allocation3], %s309
        %p311 = pneg %p45
        %p312 = pneg %p42
        %p313 = pneg %p66
        %p314 = pneg %p63
        %p315 = pneg %p87
        %p316 = pneg %p84
        %p317 = pneg %p108
        %p318 = pneg %p105
        %p319 = pneg %p129
        %p320 = pneg %p126
        %p321 = pneg %p150
        %p322 = pneg %p147
        %p323 = pneg %p171
        %p324 = pneg %p168
        %p325 = pneg %p197
        %p326 = pneg %p194
        %s327 = smul.u32 4, %s24
        %p328 = scmp.lt.s32.totalorder %s327, 7
        %s329 = scalar_select %p328, %s327, 7
        %s330 = smul.addr %s329, 8
        %s331 = scalar_lea.vmem %s7, %s330
        %s332 = smul.u32 4, %s24
        %s333 = smul.u32 4, %s24
        %p334 = scmp.lt.s32.totalorder %s333, 7
        %s335 = scalar_select %p334, %s333, 7
        %s336 = smul.addr %s335, 8
        %s337 = scalar_lea.vmem %s7, %s336
        %s338 = smul.u32 4, %s24
        %v339 = vld [vmem:[%s290] sm:$0xff]
        %v340 = vld [vmem:[%s290 + $0x8] sm:$0xff]
        %v341 = vld [vmem:[%s290 + $0x10] sm:$0xff]
        %v342 = vld [vmem:[%s290 + $0x18] sm:$0xff]
        %v343 = vld [vmem:[%s290 + $0x20] sm:$0xff]
        %v344 = vld [vmem:[%s290 + $0x28] sm:$0xff]
        %v345 = vld [vmem:[%s290 + $0x30] sm:$0xff]
        %v346 = vld [vmem:[%s290 + $0x38] sm:$0xff]
        %v347 = vld [vmem:[%s290 + $0x40] sm:$0xff]
        %v348 = vld [vmem:[%s290 + $0x48] sm:$0xff]
        %v349 = vld [vmem:[%s290 + $0x50] sm:$0xff]
        %v350 = vld [vmem:[%s290 + $0x58] sm:$0xff]
        %v351 = vld [vmem:[%s290 + $0x60] sm:$0xff]
        %v352 = vld [vmem:[%s290 + $0x68] sm:$0xff]
        %v353 = vld [vmem:[%s290 + $0x70] sm:$0xff]
        %v354 = vld [vmem:[%s290 + $0x78] sm:$0xff]
        %v355 = vpack.c.bf16 %v343, %v339
        %v356 = vpack.c.bf16 %v344, %v340
        %v357 = vpack.c.bf16 %v345, %v341
        %v358 = vpack.c.bf16 %v346, %v342
        %v359 = vpack.c.bf16 %v351, %v347
        %v360 = vpack.c.bf16 %v352, %v348
        %v361 = vpack.c.bf16 %v353, %v349
        %v362 = vpack.c.bf16 %v354, %v350
        %v363 = vld [vmem:[#allocation5] sm:$0xff]
        %v364 = vld [vmem:[#allocation5 + $0x8] sm:$0xff]
        %v365 = vld [vmem:[#allocation5 + $0x10] sm:$0xff]
        %v366 = vld [vmem:[#allocation5 + $0x18] sm:$0xff]
        %v367 = vld [vmem:[#allocation5 + $0x20] sm:$0xff]
        %v368 = vld [vmem:[#allocation5 + $0x28] sm:$0xff]
        %v369 = vld [vmem:[#allocation5 + $0x30] sm:$0xff]
        %v370 = vld [vmem:[#allocation5 + $0x38] sm:$0xff]
        %v371 = vld [vmem:[#allocation5 + $0x40] sm:$0xff]
        %v372 = vld [vmem:[#allocation5 + $0x48] sm:$0xff]
        %v373 = vld [vmem:[#allocation5 + $0x50] sm:$0xff]
        %v374 = vld [vmem:[#allocation5 + $0x58] sm:$0xff]
        %v375 = vld [vmem:[#allocation5 + $0x60] sm:$0xff]
        %v376 = vld [vmem:[#allocation5 + $0x68] sm:$0xff]
        %v377 = vld [vmem:[#allocation5 + $0x70] sm:$0xff]
        %v378 = vld [vmem:[#allocation5 + $0x78] sm:$0xff]
        %v379 = vld [vmem:[#allocation5 + $0x80] sm:$0xff]
        %v380 = vld [vmem:[#allocation5 + $0x88] sm:$0xff]
        %v381 = vld [vmem:[#allocation5 + $0x90] sm:$0xff]
        %v382 = vld [vmem:[#allocation5 + $0x98] sm:$0xff]
        %v383 = vld [vmem:[#allocation5 + $0xa0] sm:$0xff]
        %v384 = vld [vmem:[#allocation5 + $0xa8] sm:$0xff]
        %v385 = vld [vmem:[#allocation5 + $0xb0] sm:$0xff]
        %v386 = vld [vmem:[#allocation5 + $0xb8] sm:$0xff]
        %v387 = vld [vmem:[#allocation5 + $0xc0] sm:$0xff]
        %v388 = vld [vmem:[#allocation5 + $0xc8] sm:$0xff]
        %v389 = vld [vmem:[#allocation5 + $0xd0] sm:$0xff]
        %v390 = vld [vmem:[#allocation5 + $0xd8] sm:$0xff]
        %v391 = vld [vmem:[#allocation5 + $0xe0] sm:$0xff]
        %v392 = vld [vmem:[#allocation5 + $0xe8] sm:$0xff]
        %v393 = vld [vmem:[#allocation5 + $0xf0] sm:$0xff]
        %v394 = vld [vmem:[#allocation5 + $0xf8] sm:$0xff]
        %v395 = vld [vmem:[#allocation5 + $0x100] sm:$0xff]
        %v396 = vld [vmem:[#allocation5 + $0x108] sm:$0xff]
        %v397 = vld [vmem:[#allocation5 + $0x110] sm:$0xff]
        %v398 = vld [vmem:[#allocation5 + $0x118] sm:$0xff]
        %v399 = vld [vmem:[#allocation5 + $0x120] sm:$0xff]
        %v400 = vld [vmem:[#allocation5 + $0x128] sm:$0xff]
        %v401 = vld [vmem:[#allocation5 + $0x130] sm:$0xff]
        %v402 = vld [vmem:[#allocation5 + $0x138] sm:$0xff]
        %v403 = vld [vmem:[#allocation5 + $0x140] sm:$0xff]
        %v404 = vld [vmem:[#allocation5 + $0x148] sm:$0xff]
        %v405 = vld [vmem:[#allocation5 + $0x150] sm:$0xff]
        %v406 = vld [vmem:[#allocation5 + $0x158] sm:$0xff]
        %v407 = vld [vmem:[#allocation5 + $0x160] sm:$0xff]
        %v408 = vld [vmem:[#allocation5 + $0x168] sm:$0xff]
        %v409 = vld [vmem:[#allocation5 + $0x170] sm:$0xff]
        %v410 = vld [vmem:[#allocation5 + $0x178] sm:$0xff]
        %v411 = vld [vmem:[#allocation5 + $0x180] sm:$0xff]
        %v412 = vld [vmem:[#allocation5 + $0x188] sm:$0xff]
        %v413 = vld [vmem:[#allocation5 + $0x190] sm:$0xff]
        %v414 = vld [vmem:[#allocation5 + $0x198] sm:$0xff]
        %v415 = vld [vmem:[#allocation5 + $0x1a0] sm:$0xff]
        %v416 = vld [vmem:[#allocation5 + $0x1a8] sm:$0xff]
        %v417 = vld [vmem:[#allocation5 + $0x1b0] sm:$0xff]
        %v418 = vld [vmem:[#allocation5 + $0x1b8] sm:$0xff]
        %v419 = vld [vmem:[#allocation5 + $0x1c0] sm:$0xff]
        %v420 = vld [vmem:[#allocation5 + $0x1c8] sm:$0xff]
        %v421 = vld [vmem:[#allocation5 + $0x1d0] sm:$0xff]
        %v422 = vld [vmem:[#allocation5 + $0x1d8] sm:$0xff]
        %v423 = vld [vmem:[#allocation5 + $0x1e0] sm:$0xff]
        %v424 = vld [vmem:[#allocation5 + $0x1e8] sm:$0xff]
        %v425 = vld [vmem:[#allocation5 + $0x1f0] sm:$0xff]
        %v426 = vld [vmem:[#allocation5 + $0x1f8] sm:$0xff]
        %v427 = vld [vmem:[%s2] sm:$0x3]
        %v429 = vperm.slane %v427, 0
        %v430 = vperm.slane %v427, 1
        %v497 = vunpack.c.l.b16 %v363
        %v498 = vunpack.c.h.b16 %v363
        %v499 = vunpack.c.l.b16 %v364
        %v500 = vunpack.c.h.b16 %v364
        %v501 = vunpack.c.l.b16 %v365
        %v502 = vunpack.c.h.b16 %v365
        %v503 = vunpack.c.l.b16 %v366
        %v504 = vunpack.c.h.b16 %v366
        %v505 = vunpack.c.l.b16 %v367
        %v506 = vunpack.c.h.b16 %v367
        %v507 = vunpack.c.l.b16 %v368
        %v508 = vunpack.c.h.b16 %v368
        %v509 = vunpack.c.l.b16 %v369
        %v510 = vunpack.c.h.b16 %v369
        %v511 = vunpack.c.l.b16 %v370
        %v512 = vunpack.c.h.b16 %v370
        %v513 = vunpack.c.l.b16 %v371
        %v514 = vunpack.c.h.b16 %v371
        %v515 = vunpack.c.l.b16 %v372
        %v516 = vunpack.c.h.b16 %v372
        %v517 = vunpack.c.l.b16 %v373
        %v518 = vunpack.c.h.b16 %v373
        %v519 = vunpack.c.l.b16 %v374
        %v520 = vunpack.c.h.b16 %v374
        %v521 = vunpack.c.l.b16 %v375
        %v522 = vunpack.c.h.b16 %v375
        %v523 = vunpack.c.l.b16 %v376
        %v524 = vunpack.c.h.b16 %v376
        %v525 = vunpack.c.l.b16 %v377
        %v526 = vunpack.c.h.b16 %v377
        %v527 = vunpack.c.l.b16 %v378
        %v528 = vunpack.c.h.b16 %v378
        %v529 = vunpack.c.l.b16 %v379
        %v530 = vunpack.c.h.b16 %v379
        %v531 = vunpack.c.l.b16 %v380
        %v532 = vunpack.c.h.b16 %v380
        %v533 = vunpack.c.l.b16 %v381
        %v534 = vunpack.c.h.b16 %v381
        %v535 = vunpack.c.l.b16 %v382
        %v536 = vunpack.c.h.b16 %v382
        %v537 = vunpack.c.l.b16 %v383
        %v538 = vunpack.c.h.b16 %v383
        %v539 = vunpack.c.l.b16 %v384
        %v540 = vunpack.c.h.b16 %v384
        %v541 = vunpack.c.l.b16 %v385
        %v542 = vunpack.c.h.b16 %v385
        %v543 = vunpack.c.l.b16 %v386
        %v544 = vunpack.c.h.b16 %v386
        %v545 = vunpack.c.l.b16 %v387
        %v546 = vunpack.c.h.b16 %v387
        %v547 = vunpack.c.l.b16 %v388
        %v548 = vunpack.c.h.b16 %v388
        %v549 = vunpack.c.l.b16 %v389
        %v550 = vunpack.c.h.b16 %v389
        %v551 = vunpack.c.l.b16 %v390
        %v552 = vunpack.c.h.b16 %v390
        %v553 = vunpack.c.l.b16 %v391
        %v554 = vunpack.c.h.b16 %v391
        %v555 = vunpack.c.l.b16 %v392
        %v556 = vunpack.c.h.b16 %v392
        %v557 = vunpack.c.l.b16 %v393
        %v558 = vunpack.c.h.b16 %v393
        %v559 = vunpack.c.l.b16 %v394
        %v560 = vunpack.c.h.b16 %v394
        %v561 = vunpack.c.l.b16 %v395
        %v562 = vunpack.c.h.b16 %v395
        %v563 = vunpack.c.l.b16 %v396
        %v564 = vunpack.c.h.b16 %v396
        %v565 = vunpack.c.l.b16 %v397
        %v566 = vunpack.c.h.b16 %v397
        %v567 = vunpack.c.l.b16 %v398
        %v568 = vunpack.c.h.b16 %v398
        %v569 = vunpack.c.l.b16 %v399
        %v570 = vunpack.c.h.b16 %v399
        %v571 = vunpack.c.l.b16 %v400
        %v572 = vunpack.c.h.b16 %v400
        %v573 = vunpack.c.l.b16 %v401
        %v574 = vunpack.c.h.b16 %v401
        %v575 = vunpack.c.l.b16 %v402
        %v576 = vunpack.c.h.b16 %v402
        %v577 = vunpack.c.l.b16 %v403
        %v578 = vunpack.c.h.b16 %v403
        %v579 = vunpack.c.l.b16 %v404
        %v580 = vunpack.c.h.b16 %v404
        %v581 = vunpack.c.l.b16 %v405
        %v582 = vunpack.c.h.b16 %v405
        %v583 = vunpack.c.l.b16 %v406
        %v584 = vunpack.c.h.b16 %v406
        %v585 = vunpack.c.l.b16 %v407
        %v586 = vunpack.c.h.b16 %v407
        %v587 = vunpack.c.l.b16 %v408
        %v588 = vunpack.c.h.b16 %v408
        %v589 = vunpack.c.l.b16 %v409
        %v590 = vunpack.c.h.b16 %v409
        %v591 = vunpack.c.l.b16 %v410
        %v592 = vunpack.c.h.b16 %v410
        %v593 = vunpack.c.l.b16 %v411
        %v594 = vunpack.c.h.b16 %v411
        %v595 = vunpack.c.l.b16 %v412
        %v596 = vunpack.c.h.b16 %v412
        %v597 = vunpack.c.l.b16 %v413
        %v598 = vunpack.c.h.b16 %v413
        %v599 = vunpack.c.l.b16 %v414
        %v600 = vunpack.c.h.b16 %v414
        %v601 = vunpack.c.l.b16 %v415
        %v602 = vunpack.c.h.b16 %v415
        %v603 = vunpack.c.l.b16 %v416
        %v604 = vunpack.c.h.b16 %v416
        %v605 = vunpack.c.l.b16 %v417
        %v606 = vunpack.c.h.b16 %v417
        %v607 = vunpack.c.l.b16 %v418
        %v608 = vunpack.c.h.b16 %v418
        %v609 = vunpack.c.l.b16 %v419
        %v610 = vunpack.c.h.b16 %v419
        %v611 = vunpack.c.l.b16 %v420
        %v612 = vunpack.c.h.b16 %v420
        %v613 = vunpack.c.l.b16 %v421
        %v614 = vunpack.c.h.b16 %v421
        %v615 = vunpack.c.l.b16 %v422
        %v616 = vunpack.c.h.b16 %v422
        %v617 = vunpack.c.l.b16 %v423
        %v618 = vunpack.c.h.b16 %v423
        %v619 = vunpack.c.l.b16 %v424
        %v620 = vunpack.c.h.b16 %v424
        %v621 = vunpack.c.l.b16 %v425
        %v622 = vunpack.c.h.b16 %v425
        %v623 = vunpack.c.l.b16 %v426
        %v624 = vunpack.c.h.b16 %v426
        %v625 = vpack.c.b16 %v499, %v497
        %v626 = vpack.c.b16 %v500, %v498
        %v627 = vpack.c.b16 %v503, %v501
        %v628 = vpack.c.b16 %v504, %v502
        %v629 = vpack.c.b16 %v507, %v505
        %v630 = vpack.c.b16 %v508, %v506
        %v631 = vpack.c.b16 %v511, %v509
        %v632 = vpack.c.b16 %v512, %v510
        %v633 = vpack.c.b16 %v515, %v513
        %v634 = vpack.c.b16 %v516, %v514
        %v635 = vpack.c.b16 %v519, %v517
        %v636 = vpack.c.b16 %v520, %v518
        %v637 = vpack.c.b16 %v523, %v521
        %v638 = vpack.c.b16 %v524, %v522
        %v639 = vpack.c.b16 %v527, %v525
        %v640 = vpack.c.b16 %v528, %v526
        %v641 = vpack.c.b16 %v531, %v529
        %v642 = vpack.c.b16 %v532, %v530
        %v643 = vpack.c.b16 %v535, %v533
        %v644 = vpack.c.b16 %v536, %v534
        %v645 = vpack.c.b16 %v539, %v537
        %v646 = vpack.c.b16 %v540, %v538
        %v647 = vpack.c.b16 %v543, %v541
        %v648 = vpack.c.b16 %v544, %v542
        %v649 = vpack.c.b16 %v547, %v545
        %v650 = vpack.c.b16 %v548, %v546
        %v651 = vpack.c.b16 %v551, %v549
        %v652 = vpack.c.b16 %v552, %v550
        %v653 = vpack.c.b16 %v555, %v553
        %v654 = vpack.c.b16 %v556, %v554
        %v655 = vpack.c.b16 %v559, %v557
        %v656 = vpack.c.b16 %v560, %v558
        %v657 = vpack.c.b16 %v563, %v561
        %v658 = vpack.c.b16 %v564, %v562
        %v659 = vpack.c.b16 %v567, %v565
        %v660 = vpack.c.b16 %v568, %v566
        %v661 = vpack.c.b16 %v571, %v569
        %v662 = vpack.c.b16 %v572, %v570
        %v663 = vpack.c.b16 %v575, %v573
        %v664 = vpack.c.b16 %v576, %v574
        %v665 = vpack.c.b16 %v579, %v577
        %v666 = vpack.c.b16 %v580, %v578
        %v667 = vpack.c.b16 %v583, %v581
        %v668 = vpack.c.b16 %v584, %v582
        %v669 = vpack.c.b16 %v587, %v585
        %v670 = vpack.c.b16 %v588, %v586
        %v671 = vpack.c.b16 %v591, %v589
        %v672 = vpack.c.b16 %v592, %v590
        %v673 = vpack.c.b16 %v595, %v593
        %v674 = vpack.c.b16 %v596, %v594
        %v675 = vpack.c.b16 %v599, %v597
        %v676 = vpack.c.b16 %v600, %v598
        %v677 = vpack.c.b16 %v603, %v601
        %v678 = vpack.c.b16 %v604, %v602
        %v679 = vpack.c.b16 %v607, %v605
        %v680 = vpack.c.b16 %v608, %v606
        %v681 = vpack.c.b16 %v611, %v609
        %v682 = vpack.c.b16 %v612, %v610
        %v683 = vpack.c.b16 %v615, %v613
        %v684 = vpack.c.b16 %v616, %v614
        %v685 = vpack.c.b16 %v619, %v617
        %v686 = vpack.c.b16 %v620, %v618
        %v687 = vpack.c.b16 %v623, %v621
        %v688 = vpack.c.b16 %v624, %v622
        %753 = vmatpush.bf16.msra.mxu0 %v639
        %754 = vmatpush.bf16.msra.mxu0 %v637
        %755 = vmatpush.bf16.msra.mxu0 %v635
        %756 = vmatpush.bf16.msra.mxu0 %v633
        %757 = vmatpush.bf16.msra.mxu0 %v631
        %758 = vmatpush.bf16.msra.mxu0 %v629
        %759 = vmatpush.bf16.msra.mxu0 %v627
        %760 = vmatpush.bf16.msra.mxu0 %v625
        %761 = vmatmul.bf16.gmra.mxu0 %v355
        %v762 = vpop.f32.mrf.mxu0
        %v763 = vadd.f32 %v429, %v762
        %v764 = vpop.f32.mrf.mxu0
        %v765 = vadd.f32 %v429, %v764
        %766 = vmatmul.bf16.gmra.mxu0 %v359
        %v767 = vpop.f32.mrf.mxu0
        %v768 = vadd.f32 %v429, %v767
        %v769 = vpop.f32.mrf.mxu0
        %v770 = vadd.f32 %v429, %v769
        %771 = vdwg.mxu0
        %772 = vmatpush.bf16.msra.mxu0 %v655
        %773 = vmatpush.bf16.msra.mxu0 %v653
        %774 = vmatpush.bf16.msra.mxu0 %v651
        %775 = vmatpush.bf16.msra.mxu0 %v649
        %776 = vmatpush.bf16.msra.mxu0 %v647
        %777 = vmatpush.bf16.msra.mxu0 %v645
        %778 = vmatpush.bf16.msra.mxu0 %v643
        %779 = vmatpush.bf16.msra.mxu0 %v641
        %780 = vmatmul.bf16.gmra.mxu0 %v356
        %v781 = vpop.f32.mrf.mxu0
        %v782 = vadd.f32 %v763, %v781
        %v783 = vpop.f32.mrf.mxu0
        %v784 = vadd.f32 %v765, %v783
        %785 = vmatmul.bf16.gmra.mxu0 %v360
        %v786 = vpop.f32.mrf.mxu0
        %v787 = vadd.f32 %v768, %v786
        %v788 = vpop.f32.mrf.mxu0
        %v789 = vadd.f32 %v770, %v788
        %790 = vdwg.mxu0
        %791 = vmatpush.bf16.msra.mxu0 %v671
        %792 = vmatpush.bf16.msra.mxu0 %v669
        %793 = vmatpush.bf16.msra.mxu0 %v667
        %794 = vmatpush.bf16.msra.mxu0 %v665
        %795 = vmatpush.bf16.msra.mxu0 %v663
        %796 = vmatpush.bf16.msra.mxu0 %v661
        %797 = vmatpush.bf16.msra.mxu0 %v659
        %798 = vmatpush.bf16.msra.mxu0 %v657
        %799 = vmatmul.bf16.gmra.mxu0 %v357
        %v800 = vpop.f32.mrf.mxu0
        %v801 = vadd.f32 %v782, %v800
        %v802 = vpop.f32.mrf.mxu0
        %v803 = vadd.f32 %v784, %v802
        %804 = vmatmul.bf16.gmra.mxu0 %v361
        %v805 = vpop.f32.mrf.mxu0
        %v806 = vadd.f32 %v787, %v805
        %v807 = vpop.f32.mrf.mxu0
        %v808 = vadd.f32 %v789, %v807
        %809 = vdwg.mxu0
        %810 = vmatpush.bf16.msra.mxu0 %v687
        %811 = vmatpush.bf16.msra.mxu0 %v685
        %812 = vmatpush.bf16.msra.mxu0 %v683
        %813 = vmatpush.bf16.msra.mxu0 %v681
        %814 = vmatpush.bf16.msra.mxu0 %v679
        %815 = vmatpush.bf16.msra.mxu0 %v677
        %816 = vmatpush.bf16.msra.mxu0 %v675
        %817 = vmatpush.bf16.msra.mxu0 %v673
        %818 = vmatmul.bf16.gmra.mxu0 %v358
        %v819 = vpop.f32.mrf.mxu0
        %v820 = vadd.f32 %v801, %v819
        %v821 = vpop.f32.mrf.mxu0
        %v822 = vadd.f32 %v803, %v821
        %823 = vmatmul.bf16.gmra.mxu0 %v362
        %v824 = vpop.f32.mrf.mxu0
        %v825 = vadd.f32 %v806, %v824
        %v826 = vpop.f32.mrf.mxu0
        %v827 = vadd.f32 %v808, %v826
        %828 = vdwg.mxu0
        %829 = vmatpush.bf16.msra.mxu0 %v640
        %830 = vmatpush.bf16.msra.mxu0 %v638
        %831 = vmatpush.bf16.msra.mxu0 %v636
        %832 = vmatpush.bf16.msra.mxu0 %v634
        %833 = vmatpush.bf16.msra.mxu0 %v632
        %834 = vmatpush.bf16.msra.mxu0 %v630
        %835 = vmatpush.bf16.msra.mxu0 %v628
        %836 = vmatpush.bf16.msra.mxu0 %v626
        %837 = vmatmul.bf16.gmra.mxu0 %v355
        %v838 = vpop.f32.mrf.mxu0
        %v839 = vadd.f32 %v430, %v838
        %v840 = vpop.f32.mrf.mxu0
        %v841 = vadd.f32 %v430, %v840
        %842 = vmatmul.bf16.gmra.mxu0 %v359
        %v843 = vpop.f32.mrf.mxu0
        %v844 = vadd.f32 %v430, %v843
        %v845 = vpop.f32.mrf.mxu0
        %v846 = vadd.f32 %v430, %v845
        %847 = vdwg.mxu0
        %848 = vmatpush.bf16.msra.mxu0 %v656
        %849 = vmatpush.bf16.msra.mxu0 %v654
        %850 = vmatpush.bf16.msra.mxu0 %v652
        %851 = vmatpush.bf16.msra.mxu0 %v650
        %852 = vmatpush.bf16.msra.mxu0 %v648
        %853 = vmatpush.bf16.msra.mxu0 %v646
        %854 = vmatpush.bf16.msra.mxu0 %v644
        %855 = vmatpush.bf16.msra.mxu0 %v642
        %856 = vmatmul.bf16.gmra.mxu0 %v356
        %v857 = vpop.f32.mrf.mxu0
        %v858 = vadd.f32 %v839, %v857
        %v859 = vpop.f32.mrf.mxu0
        %v860 = vadd.f32 %v841, %v859
        %861 = vmatmul.bf16.gmra.mxu0 %v360
        %v862 = vpop.f32.mrf.mxu0
        %v863 = vadd.f32 %v844, %v862
        %v864 = vpop.f32.mrf.mxu0
        %v865 = vadd.f32 %v846, %v864
        %866 = vdwg.mxu0
        %867 = vmatpush.bf16.msra.mxu0 %v672
        %868 = vmatpush.bf16.msra.mxu0 %v670
        %869 = vmatpush.bf16.msra.mxu0 %v668
        %870 = vmatpush.bf16.msra.mxu0 %v666
        %871 = vmatpush.bf16.msra.mxu0 %v664
        %872 = vmatpush.bf16.msra.mxu0 %v662
        %873 = vmatpush.bf16.msra.mxu0 %v660
        %874 = vmatpush.bf16.msra.mxu0 %v658
        %875 = vmatmul.bf16.gmra.mxu0 %v357
        %v876 = vpop.f32.mrf.mxu0
        %v877 = vadd.f32 %v858, %v876
        %v878 = vpop.f32.mrf.mxu0
        %v879 = vadd.f32 %v860, %v878
        %880 = vmatmul.bf16.gmra.mxu0 %v361
        %v881 = vpop.f32.mrf.mxu0
        %v882 = vadd.f32 %v863, %v881
        %v883 = vpop.f32.mrf.mxu0
        %v884 = vadd.f32 %v865, %v883
        %885 = vdwg.mxu0
        %886 = vmatpush.bf16.msra.mxu0 %v688
        %887 = vmatpush.bf16.msra.mxu0 %v686
        %888 = vmatpush.bf16.msra.mxu0 %v684
        %889 = vmatpush.bf16.msra.mxu0 %v682
        %890 = vmatpush.bf16.msra.mxu0 %v680
        %891 = vmatpush.bf16.msra.mxu0 %v678
        %892 = vmatpush.bf16.msra.mxu0 %v676
        %893 = vmatpush.bf16.msra.mxu0 %v674
        %894 = vmatmul.bf16.gmra.mxu0 %v358
        %v895 = vpop.f32.mrf.mxu0
        %v896 = vadd.f32 %v877, %v895
        %v897 = vpop.f32.mrf.mxu0
        %v898 = vadd.f32 %v879, %v897
        %899 = vmatmul.bf16.gmra.mxu0 %v362
        %v900 = vpop.f32.mrf.mxu0
        %v901 = vadd.f32 %v882, %v900
        %v902 = vpop.f32.mrf.mxu0
        %v903 = vadd.f32 %v884, %v902
        %904 = vdwg.mxu0
        %v905 = vmax.f32 %v820, 0.0
        %v906 = vmax.f32 %v896, 0.0
        %v907 = vmax.f32 %v822, 0.0
        %v908 = vmax.f32 %v898, 0.0
        %v909 = vmax.f32 %v825, 0.0
        %v910 = vmax.f32 %v901, 0.0
        %v911 = vmax.f32 %v827, 0.0
        %v912 = vmax.f32 %v903, 0.0
        %v913 = vpack.c.bf16 %v907, %v905
        %v914 = vpack.c.bf16 %v908, %v906
        %v915 = vpack.c.bf16 %v911, %v909
        %v916 = vpack.c.bf16 %v912, %v910
        %v917 = vld [vmem:[#allocation7] sm:$0xf]
        %v918 = vld [vmem:[#allocation7 + $0x4] sm:$0xf]
        %v919 = vld [vmem:[#allocation7 + $0x8] sm:$0xf]
        %v920 = vld [vmem:[#allocation7 + $0xc] sm:$0xf]
        %v921 = vld [vmem:[#allocation7 + $0x10] sm:$0xf]
        %v922 = vld [vmem:[#allocation7 + $0x14] sm:$0xf]
        %v923 = vld [vmem:[#allocation7 + $0x18] sm:$0xf]
        %v924 = vld [vmem:[#allocation7 + $0x1c] sm:$0xf]
        %v925 = vld [vmem:[#allocation7 + $0x20] sm:$0xf]
        %v926 = vld [vmem:[#allocation7 + $0x24] sm:$0xf]
        %v927 = vld [vmem:[#allocation7 + $0x28] sm:$0xf]
        %v928 = vld [vmem:[#allocation7 + $0x2c] sm:$0xf]
        %v929 = vld [vmem:[#allocation7 + $0x30] sm:$0xf]
        %v930 = vld [vmem:[#allocation7 + $0x34] sm:$0xf]
        %v931 = vld [vmem:[#allocation7 + $0x38] sm:$0xf]
        %v932 = vld [vmem:[#allocation7 + $0x3c] sm:$0xf]
        %v933 = vld [vmem:[#allocation7 + $0x40] sm:$0xf]
        %v934 = vld [vmem:[#allocation7 + $0x44] sm:$0xf]
        %v935 = vld [vmem:[#allocation7 + $0x48] sm:$0xf]
        %v936 = vld [vmem:[#allocation7 + $0x4c] sm:$0xf]
        %v937 = vld [vmem:[#allocation7 + $0x50] sm:$0xf]
        %v938 = vld [vmem:[#allocation7 + $0x54] sm:$0xf]
        %v939 = vld [vmem:[#allocation7 + $0x58] sm:$0xf]
        %v940 = vld [vmem:[#allocation7 + $0x5c] sm:$0xf]
        %v941 = vld [vmem:[#allocation7 + $0x60] sm:$0xf]
        %v942 = vld [vmem:[#allocation7 + $0x64] sm:$0xf]
        %v943 = vld [vmem:[#allocation7 + $0x68] sm:$0xf]
        %v944 = vld [vmem:[#allocation7 + $0x6c] sm:$0xf]
        %v945 = vld [vmem:[#allocation7 + $0x70] sm:$0xf]
        %v946 = vld [vmem:[#allocation7 + $0x74] sm:$0xf]
        %v947 = vld [vmem:[#allocation7 + $0x78] sm:$0xf]
        %v948 = vld [vmem:[#allocation7 + $0x7c] sm:$0xf]
        %v949 = vld [vmem:[%s4] sm:$0x1]
        %v951 = vperm.slane %v949, 0
        %v985 = vunpack.c.l.b16 %v917
        %v986 = vunpack.c.l.b16 %v918
        %v987 = vunpack.c.l.b16 %v919
        %v988 = vunpack.c.l.b16 %v920
        %v989 = vunpack.c.l.b16 %v921
        %v990 = vunpack.c.l.b16 %v922
        %v991 = vunpack.c.l.b16 %v923
        %v992 = vunpack.c.l.b16 %v924
        %v993 = vunpack.c.l.b16 %v925
        %v994 = vunpack.c.l.b16 %v926
        %v995 = vunpack.c.l.b16 %v927
        %v996 = vunpack.c.l.b16 %v928
        %v997 = vunpack.c.l.b16 %v929
        %v998 = vunpack.c.l.b16 %v930
        %v999 = vunpack.c.l.b16 %v931
        %v1000 = vunpack.c.l.b16 %v932
        %v1001 = vunpack.c.l.b16 %v933
        %v1002 = vunpack.c.l.b16 %v934
        %v1003 = vunpack.c.l.b16 %v935
        %v1004 = vunpack.c.l.b16 %v936
        %v1005 = vunpack.c.l.b16 %v937
        %v1006 = vunpack.c.l.b16 %v938
        %v1007 = vunpack.c.l.b16 %v939
        %v1008 = vunpack.c.l.b16 %v940
        %v1009 = vunpack.c.l.b16 %v941
        %v1010 = vunpack.c.l.b16 %v942
        %v1011 = vunpack.c.l.b16 %v943
        %v1012 = vunpack.c.l.b16 %v944
        %v1013 = vunpack.c.l.b16 %v945
        %v1014 = vunpack.c.l.b16 %v946
        %v1015 = vunpack.c.l.b16 %v947
        %v1016 = vunpack.c.l.b16 %v948
        %v1017 = vpack.c.b16 %v986, %v985
        %v1018 = vpack.c.b16 %v988, %v987
        %v1019 = vpack.c.b16 %v990, %v989
        %v1020 = vpack.c.b16 %v992, %v991
        %v1021 = vpack.c.b16 %v994, %v993
        %v1022 = vpack.c.b16 %v996, %v995
        %v1023 = vpack.c.b16 %v998, %v997
        %v1024 = vpack.c.b16 %v1000, %v999
        %v1025 = vpack.c.b16 %v1002, %v1001
        %v1026 = vpack.c.b16 %v1004, %v1003
        %v1027 = vpack.c.b16 %v1006, %v1005
        %v1028 = vpack.c.b16 %v1008, %v1007
        %v1029 = vpack.c.b16 %v1010, %v1009
        %v1030 = vpack.c.b16 %v1012, %v1011
        %v1031 = vpack.c.b16 %v1014, %v1013
        %v1032 = vpack.c.b16 %v1016, %v1015
        %1049 = vmatpush.bf16.msra.mxu0 %v1024
        %1050 = vmatpush.bf16.msra.mxu0 %v1023
        %1051 = vmatpush.bf16.msra.mxu0 %v1022
        %1052 = vmatpush.bf16.msra.mxu0 %v1021
        %1053 = vmatpush.bf16.msra.mxu0 %v1020
        %1054 = vmatpush.bf16.msra.mxu0 %v1019
        %1055 = vmatpush.bf16.msra.mxu0 %v1018
        %1056 = vmatpush.bf16.msra.mxu0 %v1017
        %1057 = vmatmul.bf16.gmra.mxu0 %v913
        %v1058 = vpop.f32.mrf.mxu0
        %v1059 = vadd.f32 %v951, %v1058
        %v1060 = vpop.f32.mrf.mxu0
        %v1061 = vadd.f32 %v951, %v1060
        %1062 = vmatmul.bf16.gmra.mxu0 %v915
        %v1063 = vpop.f32.mrf.mxu0
        %v1064 = vadd.f32 %v951, %v1063
        %v1065 = vpop.f32.mrf.mxu0
        %v1066 = vadd.f32 %v951, %v1065
        %1067 = vdwg.mxu0
        %1068 = vmatpush.bf16.msra.mxu0 %v1032
        %1069 = vmatpush.bf16.msra.mxu0 %v1031
        %1070 = vmatpush.bf16.msra.mxu0 %v1030
        %1071 = vmatpush.bf16.msra.mxu0 %v1029
        %1072 = vmatpush.bf16.msra.mxu0 %v1028
        %1073 = vmatpush.bf16.msra.mxu0 %v1027
        %1074 = vmatpush.bf16.msra.mxu0 %v1026
        %1075 = vmatpush.bf16.msra.mxu0 %v1025
        %1076 = vmatmul.bf16.gmra.mxu0 %v914
        %v1077 = vpop.f32.mrf.mxu0
        %v1078 = vadd.f32 %v1059, %v1077
        %v1079 = vpop.f32.mrf.mxu0
        %v1080 = vadd.f32 %v1061, %v1079
        %1081 = vmatmul.bf16.gmra.mxu0 %v916
        %v1082 = vpop.f32.mrf.mxu0
        %v1083 = vadd.f32 %v1064, %v1082
        %v1084 = vpop.f32.mrf.mxu0
        %v1085 = vadd.f32 %v1066, %v1084
        %1086 = vdwg.mxu0
        %v1087 = vmax.f32 %v1078, 0.0
        %v1088 = vmax.f32 %v1080, 0.0
        %v1089 = vmax.f32 %v1083, 0.0
        %v1090 = vmax.f32 %v1085, 0.0
        %v1091 = vpack.c.bf16 %v1088, %v1087
        %v1092 = vpack.c.bf16 %v1090, %v1089
        %v1093 = vld [vmem:[%s5] sm:$0xf]
        %v1094 = vld [vmem:[%s5 + $0x4] sm:$0xf]
        %v1095 = vld [vmem:[%s5 + $0x8] sm:$0xf]
        %v1096 = vld [vmem:[%s5 + $0xc] sm:$0xf]
        %v1097 = vld [vmem:[%s5 + $0x10] sm:$0xf]
        %v1098 = vld [vmem:[%s5 + $0x14] sm:$0xf]
        %v1099 = vld [vmem:[%s5 + $0x18] sm:$0xf]
        %v1100 = vld [vmem:[%s5 + $0x1c] sm:$0xf]
        %v1101 = vld [vmem:[%s5 + $0x20] sm:$0xf]
        %v1102 = vld [vmem:[%s5 + $0x24] sm:$0xf]
        %v1103 = vld [vmem:[%s5 + $0x28] sm:$0xf]
        %v1104 = vld [vmem:[%s5 + $0x2c] sm:$0xf]
        %v1105 = vld [vmem:[%s5 + $0x30] sm:$0xf]
        %v1106 = vld [vmem:[%s5 + $0x34] sm:$0xf]
        %v1107 = vld [vmem:[%s5 + $0x38] sm:$0xf]
        %v1108 = vld [vmem:[%s5 + $0x3c] sm:$0xf]
        %v1109 = vld [vmem:[#allocation2] sm:$0x1]
        %v1111 = vperm.slane %v1109, 0
        %v1129 = vunpack.c.l.b16 %v1093
        %v1130 = vunpack.c.l.b16 %v1094
        %v1131 = vunpack.c.l.b16 %v1095
        %v1132 = vunpack.c.l.b16 %v1096
        %v1133 = vunpack.c.l.b16 %v1097
        %v1134 = vunpack.c.l.b16 %v1098
        %v1135 = vunpack.c.l.b16 %v1099
        %v1136 = vunpack.c.l.b16 %v1100
        %v1137 = vunpack.c.l.b16 %v1101
        %v1138 = vunpack.c.l.b16 %v1102
        %v1139 = vunpack.c.l.b16 %v1103
        %v1140 = vunpack.c.l.b16 %v1104
        %v1141 = vunpack.c.l.b16 %v1105
        %v1142 = vunpack.c.l.b16 %v1106
        %v1143 = vunpack.c.l.b16 %v1107
        %v1144 = vunpack.c.l.b16 %v1108
        %v1145 = vpack.c.b16 %v1130, %v1129
        %v1146 = vpack.c.b16 %v1132, %v1131
        %v1147 = vpack.c.b16 %v1134, %v1133
        %v1148 = vpack.c.b16 %v1136, %v1135
        %v1149 = vpack.c.b16 %v1138, %v1137
        %v1150 = vpack.c.b16 %v1140, %v1139
        %v1151 = vpack.c.b16 %v1142, %v1141
        %v1152 = vpack.c.b16 %v1144, %v1143
        %1161 = vmatpush.bf16.msra.mxu0 %v1152
        %1162 = vmatpush.bf16.msra.mxu0 %v1151
        %1163 = vmatpush.bf16.msra.mxu0 %v1150
        %1164 = vmatpush.bf16.msra.mxu0 %v1149
        %1165 = vmatpush.bf16.msra.mxu0 %v1148
        %1166 = vmatpush.bf16.msra.mxu0 %v1147
        %1167 = vmatpush.bf16.msra.mxu0 %v1146
        %1168 = vmatpush.bf16.msra.mxu0 %v1145
        %1169 = vmatmul.bf16.gmra.mxu0 %v1091
        %v1170 = vpop.f32.mrf.mxu0
        %v1171 = vadd.f32 %v1111, %v1170
        %v1172 = vpop.f32.mrf.mxu0
        %v1173 = vadd.f32 %v1111, %v1172
        %1174 = vmatmul.bf16.gmra.mxu0 %v1092
        %v1175 = vpop.f32.mrf.mxu0
        %v1176 = vadd.f32 %v1111, %v1175
        %v1177 = vpop.f32.mrf.mxu0
        %v1178 = vadd.f32 %v1111, %v1177
        %1179 = vdwg.mxu0
        %vm1180 = vcmask 7168
        %1181 = vst.msk [vmem:[%s337] sm:$0xff] %vm1180, %v1171
        %1182 = vst.msk [vmem:[%s337 + $0x8] sm:$0xff] %vm1180, %v1173
        %1183 = vst.msk [vmem:[%s337 + $0x10] sm:$0xff] %vm1180, %v1176
        %1184 = vst.msk [vmem:[%s337 + $0x18] sm:$0xff] %vm1180, %v1178
        %s1185 = smul.u32 4, %s24
        %p1186 = scmp.lt.s32.totalorder %s1185, 7
        %s1187 = scalar_select %p1186, %s1185, 7
        %s1188 = smul.addr %s1187, 8
        %s1189 = scalar_lea.vmem %s7, %s1188
        // Predicated region
        $region61: #{tpu_custom_call.1} parent=47 // pred_check
          %p1190 = pneg %p194
        $region62: #{tpu_custom_call.1} parent=47 // pred_check_branch
          %1192 = sbr.rel (%p1190) target = $region64
        $region63: #{tpu_custom_call.1} parent=47 // pred_region
          %s1193 = smul.u32 4, %s24
        $region64: #{tpu_custom_call.1} parent=47 // pred_fallthru
          _
      $region48: #{tpu_custom_call.1} parent=5 // pred_fallthru
        _
      %p1194 = scmp.le.s32.totalorder 2, %s19
      // Predicated region
      $region65: #{tpu_custom_call.1} parent=5 // pred_check
        %p1195 = pneg %p1194
      $region66: #{tpu_custom_call.1} parent=5 // pred_check_branch
        %1197 = sbr.rel (%p1195) target = $region68
      $region67: #{tpu_custom_call.1} parent=5 // pred_region
        %s1198 = ssub.s32 %s19, 2
        // Predicated region
        $region69: #{tpu_custom_call.1} parent=67 // pred_check
          %p1199 = pneg %p200
        $region70: #{tpu_custom_call.1} parent=67 // pred_check_branch
          %1201 = sbr.rel (%p1199) target = $region72
        $region71: #{tpu_custom_call.1} parent=67 // pred_region
          %s1202 = smul.u32 4, %s25
          %p1203 = scmp.lt.s32.totalorder %s1202, 7
          %s1204 = scalar_select %p1203, %s1202, 7
          %s1205 = smul.addr %s1204, 8
          %s1206 = scalar_lea.vmem %s7, %s1205
        $region72: #{tpu_custom_call.1} parent=67 // pred_fallthru
          _
      $region68: #{tpu_custom_call.1} parent=5 // pred_fallthru
        _
    $region6: #{tpu_custom_call.1} parent=1 // loop_footer
      %s23 = sadd.s32 1, %s19
    $region7: #{tpu_custom_call.1} parent=1 // loop_footer_branch
      %18 = sbr.rel target = $region3
    $region8: #{tpu_custom_call.1} parent=1 // loop_exit
      _
    %1207 = vsyncpa [#allocation4], 1
    %s1208 = scalar_lea.sflag [#allocation4], 1
    %1209 = vsyncpa %s1208, 1
    %1210 = vsyncpa [#allocation6], 1

</llo_original>
